<compile_context>
chip_gen: v7x
topology: tpu7x:2x2x1
jax: 0.10.0
libtpu: 0.0.40
codegen_flags: <defaults>
</compile_context>

<pallas_src>
import math

import jax
import jax.numpy as jnp
from jax.experimental import pallas as pl
from jax.experimental.pallas import tpu as pltpu


def hgconv_kernel(x_ref, w_ref, acat_ref, mask_ref, b_ref, o_ref):
    # x_ref:    (B*N, Fin)          flattened batch of node features
    # w_ref:    (Fin, 4*Fout)       [W0 | W1 | W2 | W3] packed on the lane axis
    # acat_ref: (B*N, 4*B*N)        batch-block-diag, order-concat softmax probs
    # mask_ref: (4*B*N, 4*Fout)     block-diagonal 0/1 mask (row block k keeps
    #                               only lane block k)
    # b_ref:    (1, 4*Fout)         bias
    # o_ref:    (B*N, 4*Fout)       flattened output (== torch.cat(..., dim=2))

    # MXU push 1: h = x @ [W0|W1|W2|W3]  (all four orders in one lane-dense push).
    h = jnp.dot(x_ref[...], w_ref[...],
                preferred_element_type=jnp.float32)          # (B*N, 4*Fout), f32

    # Build the block-diagonal H_bd: row block k carries only lane block k of h.
    h_rep = jnp.concatenate([h, h, h, h], axis=0)            # (4*B*N, 4*Fout)
    h_bd = h_rep * mask_ref[...]

    # MXU push 2: out = A_cat @ H_bd — one 4*B*N-deep, 4*Fout-lane push that
    # applies all four per-order attentions to both batch elements at once.
    out = jnp.dot(acat_ref[...], h_bd,
                  preferred_element_type=jnp.float32)        # (B*N, 4*Fout)

    # Bias add + single unmasked, lane-dense store (4*Fout = 128 lanes here).
    o_ref[...] = out + b_ref[...]


def hgraph_conv(x, W, A_logits, bias):
    """x: (B,N,Fin), W: (4,Fin,Fout), A_logits: (4,N,N), bias: (4*Fout,)."""
    B, N, Fin = x.shape
    _, _, Fout = W.shape

    # ---- grid-invariant preprocessing, hoisted out of the kernel ------------
    # Packed weights: W_all[:, k*Fout + f] = W[k, :, f].
    W_all = jnp.transpose(W, (1, 0, 2)).reshape(Fin, 4 * Fout)

    # Softmax of the masked logits (torch F.softmax dim=1), computed ONCE here.
    attn = jax.nn.softmax(A_logits, axis=2)                   # (4, N, N), f32

    # A_cat[b*N+i, (k*B+b')*N+j] = attn[k,i,j] * (b == b')
    A_cat = jnp.einsum('kij,bc->bikcj', attn,
                       jnp.eye(B, dtype=attn.dtype))          # (B,N,4,B,N)
    A_cat = A_cat.reshape(B * N, 4 * B * N)

    # Block-diagonal mask used to build H_bd in-kernel.
    row_blk = jnp.arange(4 * B * N) // (B * N)
    col_blk = jnp.arange(4 * Fout) // Fout
    bd_mask = (row_blk[:, None] == col_blk[None, :]).astype(jnp.float32)

    x_flat = x.reshape(B * N, Fin)
    bias2d = bias.reshape(1, 4 * Fout)
    # -------------------------------------------------------------------------

    out_flat = pl.pallas_call(
        hgconv_kernel,
        out_shape=jax.ShapeDtypeStruct((B * N, 4 * Fout), jnp.float32),
        grid=(1,),
        in_specs=[
            pl.BlockSpec((B * N, Fin), lambda i: (0, 0)),
            pl.BlockSpec((Fin, 4 * Fout), lambda i: (0, 0)),
            pl.BlockSpec((B * N, 4 * B * N), lambda i: (0, 0)),
            pl.BlockSpec((4 * B * N, 4 * Fout), lambda i: (0, 0)),
            pl.BlockSpec((1, 4 * Fout), lambda i: (0, 0)),
        ],
        out_specs=pl.BlockSpec((B * N, 4 * Fout), lambda i: (0, 0)),
    )(x_flat, W_all, A_cat, bd_mask, bias2d)

    # Row-major leading-dim split: metadata-only reshape, no extra HBM traffic.
    return out_flat.reshape(B, N, 4 * Fout)


def build_params(key, in_features, out_features, adj):
    """Deterministic parameter init mirroring HGraphConv.__init__ (out_features != 3)."""
    N = adj.shape[0]
    k_w, k_b = jax.random.split(key, 2)

    # W: (4, in, out), xavier_uniform with gain=1.414
    # (PyTorch fan_in = in*out, fan_out = 4*out for a 3D tensor).
    fan_in = in_features * out_features
    fan_out = 4 * out_features
    bound = 1.414 * math.sqrt(6.0 / (fan_in + fan_out))
    W = jax.random.uniform(k_w, (4, in_features, out_features),
                           jnp.float32, -bound, bound)

    # Edge parameters e_k are initialized to constant 1; scattering them into
    # adj_k > 0 positions is equivalent to a dense ones matrix gated by the mask.
    # NOTE: the -9e15 masked softmax is only safe because self-loops guarantee
    # every row of every adjacency power has at least one unmasked entry.
    adj_0 = jnp.eye(N, dtype=jnp.float32)
    adj_1 = adj
    adj_2 = adj_1 @ adj
    adj_3 = adj_2 @ adj
    NEG = jnp.float32(-9.0e15)
    ones = jnp.ones((N, N), jnp.float32)
    A_logits = jnp.stack([
        jnp.where(adj_0 > 0, ones, NEG),
        jnp.where(adj_1 > 0, ones, NEG),
        jnp.where(adj_2 > 0, ones, NEG),
        jnp.where(adj_3 > 0, ones, NEG),
    ], axis=0)

    # bias: (4*out,) ~ U(-stdv, stdv), stdv = 1/sqrt(out_features)
    stdv = 1.0 / math.sqrt(out_features)
    bias = jax.random.uniform(k_b, (4 * out_features,), jnp.float32, -stdv, stdv)

    # TODO(synk): the `out_features is not 3` branch (sum of orders + bias_2) is
    # not taken for this configuration and is not implemented here.
    return W, A_logits, bias


def reference(x, W, A_logits, bias):
    """Plain-JAX f32 reference of the PyTorch forward (out_features != 3 path)."""
    attn = jax.nn.softmax(A_logits, axis=2)                           # (4, N, N)
    h = jnp.einsum('bni,kio->kbno', x, W,
                   preferred_element_type=jnp.float32)                # (4,B,N,Fout)
    out = jnp.einsum('knm,kbmo->kbno', attn, h,
                     preferred_element_type=jnp.float32)              # (4,B,N,Fout)
    B, N = x.shape[0], x.shape[1]
    cat = jnp.transpose(out, (1, 2, 0, 3)).reshape(B, N, -1)
    return cat + bias[None, None, :]


if __name__ == "__main__":
    B, N, Fin, Fout = 2, 16, 8, 32
    key = jax.random.PRNGKey(0)
    k_adj, k_x, k_p = jax.random.split(key, 3)

    # Random sparse-ish adjacency with self-loops, float32 as in the module.
    adj = (jax.random.uniform(k_adj, (N, N)) > 0.6).astype(jnp.float32)
    adj = adj + jnp.eye(N, dtype=jnp.float32)

    x = jax.random.normal(k_x, (B, N, Fin), jnp.float32)

    W, A_logits, bias = build_params(k_p, Fin, Fout, adj)

    out = hgraph_conv(x, W, A_logits, bias)
    out = jax.block_until_ready(out)

    ref = reference(x, W, A_logits, bias)
    assert out.shape == (B, N, 4 * Fout)
    assert jnp.allclose(out, ref, atol=2e-2, rtol=2e-2), "mismatch vs reference"

    print("KERNEL_OK")
</pallas_src>

<mosaic_0001>
module attributes {stable_mosaic.version = 11 : i64} {
  func.func @hgconv_kernel(%arg0: i32, %arg1: memref<32x8xf32, #tpu.memory_space<vmem>>, %arg2: memref<8x128xf32, #tpu.memory_space<vmem>>, %arg3: memref<32x128xf32, #tpu.memory_space<vmem>>, %arg4: memref<128x128xf32, #tpu.memory_space<vmem>>, %arg5: memref<1x128xf32, #tpu.memory_space<vmem>>, %arg6: memref<32x128xf32, #tpu.memory_space<vmem>>) attributes {dimension_semantics = [#tpu.dimension_semantics<arbitrary>], iteration_bounds = array<i64: 1>, scalar_prefetch = 0 : i64, scratch_operands = 0 : i64, tpu.core_type = #tpu.core_type<tc>, window_params = [{pipeline_mode = #tpu.pipeline_mode<synchronous>, transform_indices = @transform_0, window_bounds = array<i64: 32, 8>}, {pipeline_mode = #tpu.pipeline_mode<synchronous>, transform_indices = @transform_1, window_bounds = array<i64: 8, 128>}, {pipeline_mode = #tpu.pipeline_mode<synchronous>, transform_indices = @transform_2, window_bounds = array<i64: 32, 128>}, {pipeline_mode = #tpu.pipeline_mode<synchronous>, transform_indices = @transform_3, window_bounds = array<i64: 128, 128>}, {pipeline_mode = #tpu.pipeline_mode<synchronous>, transform_indices = @transform_4, window_bounds = array<i64: 1, 128>}, {pipeline_mode = #tpu.pipeline_mode<synchronous>, transform_indices = @transform_5, window_bounds = array<i64: 32, 128>}]} {
    %c0 = arith.constant 0 : index
    %c0_0 = arith.constant 0 : index
    %0 = vector.load %arg1[%c0, %c0_0] : memref<32x8xf32, #tpu.memory_space<vmem>>, vector<32x8xf32>
    %c0_1 = arith.constant 0 : index
    %c0_2 = arith.constant 0 : index
    %1 = vector.load %arg2[%c0_1, %c0_2] : memref<8x128xf32, #tpu.memory_space<vmem>>, vector<8x128xf32>
    %cst = arith.constant dense<0.000000e+00> : vector<32x128xf32>
    %2 = tpu.matmul %0, %1, %cst {dimension_numbers = #tpu.dot_dimension_numbers<[1], [0], [0], [1], [0, 0, 1, 1], [], []>} : vector<32x8xf32>, vector<8x128xf32>, vector<32x128xf32> -> vector<32x128xf32>
    %3 = tpu.concatenate %2, %2, %2, %2 in 0 : vector<32x128xf32>, vector<32x128xf32>, vector<32x128xf32>, vector<32x128xf32> -> vector<128x128xf32>
    %c0_3 = arith.constant 0 : index
    %c0_4 = arith.constant 0 : index
    %4 = vector.load %arg4[%c0_3, %c0_4] : memref<128x128xf32, #tpu.memory_space<vmem>>, vector<128x128xf32>
    %5 = arith.mulf %3, %4 : vector<128x128xf32>
    %c0_5 = arith.constant 0 : index
    %c0_6 = arith.constant 0 : index
    %6 = vector.load %arg3[%c0_5, %c0_6] : memref<32x128xf32, #tpu.memory_space<vmem>>, vector<32x128xf32>
    %cst_7 = arith.constant dense<0.000000e+00> : vector<32x128xf32>
    %7 = tpu.matmul %6, %5, %cst_7 {dimension_numbers = #tpu.dot_dimension_numbers<[1], [0], [0], [1], [0, 0, 1, 1], [], []>} : vector<32x128xf32>, vector<128x128xf32>, vector<32x128xf32> -> vector<32x128xf32>
    %c0_8 = arith.constant 0 : index
    %c0_9 = arith.constant 0 : index
    %8 = vector.load %arg5[%c0_8, %c0_9] : memref<1x128xf32, #tpu.memory_space<vmem>>, vector<1x128xf32>
    %9 = vector.broadcast %8 : vector<1x128xf32> to vector<32x128xf32>
    %10 = arith.addf %7, %9 : vector<32x128xf32>
    %c0_10 = arith.constant 0 : index
    %c0_11 = arith.constant 0 : index
    %11 = vector.load %arg6[%c0_10, %c0_11] : memref<32x128xf32, #tpu.memory_space<vmem>>, vector<32x128xf32>
    tpu.vector_store %arg6[%c0_10, %c0_11], %10 {strides = array<i32>} : memref<32x128xf32, #tpu.memory_space<vmem>>, vector<32x128xf32>,
    return
  }
  func.func @transform_0(%arg0: i32) -> (i32, i32) {
    %c0_i32 = arith.constant 0 : i32
    %c0_i32_0 = arith.constant 0 : i32
    %c0_i32_1 = arith.constant 0 : i32
    return %c0_i32, %c0_i32_0 : i32, i32
  }
  func.func @transform_1(%arg0: i32) -> (i32, i32) {
    %c0_i32 = arith.constant 0 : i32
    %c0_i32_0 = arith.constant 0 : i32
    %c0_i32_1 = arith.constant 0 : i32
    return %c0_i32, %c0_i32_0 : i32, i32
  }
  func.func @transform_2(%arg0: i32) -> (i32, i32) {
    %c0_i32 = arith.constant 0 : i32
    %c0_i32_0 = arith.constant 0 : i32
    %c0_i32_1 = arith.constant 0 : i32
    return %c0_i32, %c0_i32_0 : i32, i32
  }
  func.func @transform_3(%arg0: i32) -> (i32, i32) {
    %c0_i32 = arith.constant 0 : i32
    %c0_i32_0 = arith.constant 0 : i32
    %c0_i32_1 = arith.constant 0 : i32
    return %c0_i32, %c0_i32_0 : i32, i32
  }
  func.func @transform_4(%arg0: i32) -> (i32, i32) {
    %c0_i32 = arith.constant 0 : i32
    %c0_i32_0 = arith.constant 0 : i32
    %c0_i32_1 = arith.constant 0 : i32
    return %c0_i32, %c0_i32_0 : i32, i32
  }
  func.func @transform_5(%arg0: i32) -> (i32, i32) {
    %c0_i32 = arith.constant 0 : i32
    %c0_i32_0 = arith.constant 0 : i32
    %c0_i32_1 = arith.constant 0 : i32
    return %c0_i32, %c0_i32_0 : i32, i32
  }
}

</mosaic_0001>

<llo_original>
// kernel: tpu_custom_call.1
$region0: #{tpu_custom_call.1}
  #allocation0 [shape = 'u32[]', space=smem, size = 0x4, offset = 0x4, fixed_abs, tag = 'smem constant byte address 0x4 - core index']
  #allocation1 [shape = 'u32[144,128]{1,0:T(1,128)}', space=vmem, size = 0x12000, scoped, tag = 'internal scratch']
  %s0 = inlined_call_operand.vmem [shape: f32[32,8], index: 0, kind: input, shape index: {}]
  %s1 = inlined_call_operand.vmem [shape: f32[8,128], index: 1, kind: input, shape index: {}]
  %s2 = inlined_call_operand.vmem [shape: f32[32,128], index: 2, kind: input, shape index: {}]
  %s3 = inlined_call_operand.hbm [shape: f32[128,128], index: 3, kind: input, shape index: {}]
  %s4 = inlined_call_operand.vmem [shape: f32[1,128], index: 4, kind: input, shape index: {}]
  %s5 = inlined_call_operand.hbm [shape: f32[32,128], index: 5, kind: output, shape index: {}]
  %s6 = sld [smem:[#allocation0]]
  $region34: #{tpu_custom_call.1} parent=0
    _
  %s8 = ssub.s32 1, %s6
  %s9 = scalar_select 0, %s8, %s6
  $region1: #{tpu_custom_call.1} parent=0
    #allocation2 [shape = 'u8[65536]{0}', space=vmem, size = 0x10000, scoped, tag = 'input window, operand 3, single buffered']
    #allocation3 [shape = 's32[1]{0}', space=sflag, size = 0x4, scoped, tag = 'scoped memory for tpu_custom_call.1']
    #allocation4 [shape = 's32[1]{0}', space=sflag, size = 0x4, scoped, tag = 'scoped memory for tpu_custom_call.1']
    #allocation5 [shape = 'u8[16384]{0}', space=vmem, size = 0x4000, scoped, tag = 'output window, operand 0, single buffered']
    %10 = vsyncpa [#allocation3], 0
    %11 = vsyncpa [#allocation4], 0
    // Predicated region
    $region2: #{tpu_custom_call.1} parent=1 // pred_check
      _
    $region3: #{tpu_custom_call.1} parent=1 // pred_check_branch
      %13 = sbr.rel (0) target = $region5
    $region4: #{tpu_custom_call.1} parent=1 // pred_region
      _
    $region5: #{tpu_custom_call.1} parent=1 // pred_fallthru
      _
    // Predicated region
    $region6: #{tpu_custom_call.1} parent=1 // pred_check
      _
    $region7: #{tpu_custom_call.1} parent=1 // pred_check_branch
      %15 = sbr.rel (0) target = $region9
    $region8: #{tpu_custom_call.1} parent=1 // pred_region
      _
    $region9: #{tpu_custom_call.1} parent=1 // pred_fallthru
      _
    // Predicated region
    $region10: #{tpu_custom_call.1} parent=1 // pred_check
      _
    $region11: #{tpu_custom_call.1} parent=1 // pred_check_branch
      %17 = sbr.rel (0) target = $region13
    $region12: #{tpu_custom_call.1} parent=1 // pred_region
      _
    $region13: #{tpu_custom_call.1} parent=1 // pred_fallthru
      _
    // Predicated region
    $region14: #{tpu_custom_call.1} parent=1 // pred_check
      _
    $region15: #{tpu_custom_call.1} parent=1 // pred_check_branch
      %19 = sbr.rel (0) target = $region17
    $region16: #{tpu_custom_call.1} parent=1 // pred_region
      %s21 = ssub.s32 2048, 2048
      %22 = vsyncadd [#allocation3], %s21
      %s23 = sshll.u32 [#allocation2], 4
      %s24 = int_to_ptr.vmem [resolvable:$true] %s23
      %29 = dma.hbm_to_vmem [thread:$0]  %s3, 2048, %s24, [#allocation3], 128, 128, 8
    $region17: #{tpu_custom_call.1} parent=1 // pred_fallthru
      _
    // Predicated region
    $region18: #{tpu_custom_call.1} parent=1 // pred_check
      _
    $region19: #{tpu_custom_call.1} parent=1 // pred_check_branch
      %31 = sbr.rel (0) target = $region21
    $region20: #{tpu_custom_call.1} parent=1 // pred_region
      _
    $region21: #{tpu_custom_call.1} parent=1 // pred_fallthru
      _
    // Predicated region
    $region22: #{tpu_custom_call.1} parent=1 // pred_check
      _
    $region23: #{tpu_custom_call.1} parent=1 // pred_check_branch
      %33 = sbr.rel (0) target = $region25
    $region24: #{tpu_custom_call.1} parent=1 // pred_region
      %34 = dma.done [#allocation3], 2048
    $region25: #{tpu_custom_call.1} parent=1 // pred_fallthru
      _
    %v35 = vld [vmem:[%s0] sm:$0xff]
    %v36 = vld [vmem:[%s0 + $0x8] sm:$0xff]
    %v37 = vld [vmem:[%s0 + $0x10] sm:$0xff]
    %v38 = vld [vmem:[%s0 + $0x18] sm:$0xff]
    %v39 = vld [vmem:[%s1] sm:$0xff]
    %vm40 = vcmask 64512
    %v42 = vsel %vm40, %v35, 0
    %v45 = vsel %vm40, %v36, 0
    %v48 = vsel %vm40, %v37, 0
    %v51 = vsel %vm40, %v38, 0
    %53 = vmatprep.subr.mxu0 0.0
    %54 = vmatpush1.msra.mxu0 %v39
    %55 = vmatprep.subr.mxu0 0.0
    %56 = vmatpush1.msra.mxu0 0.0
    %57 = vmatprep.subr.mxu0 0.0
    %58 = vmatpush1.msra.mxu0 0.0
    %59 = vmatprep.subr.mxu0 0.0
    %60 = vmatpush1.msra.mxu0 0.0
    %61 = vmatprep.subr.mxu0 0.0
    %62 = vmatpush1.msra.mxu0 0.0
    %63 = vmatprep.subr.mxu0 0.0
    %64 = vmatpush1.msra.mxu0 0.0
    %65 = vmatprep.subr.mxu0 0.0
    %66 = vmatpush1.msra.mxu0 0.0
    %67 = vmatprep.subr.mxu0 0.0
    %68 = vmatpush1.msra.mxu0 0.0
    %69 = vmatprep.subr.mxu0 0.0
    %70 = vmatpush1.msra.mxu0 0.0
    %71 = vmatprep.subr.mxu0 0.0
    %72 = vmatpush1.msra.mxu0 0.0
    %73 = vmatprep.subr.mxu0 0.0
    %74 = vmatpush1.msra.mxu0 0.0
    %75 = vmatprep.subr.mxu0 0.0
    %76 = vmatpush1.msra.mxu0 0.0
    %77 = vmatprep.subr.mxu0 0.0
    %78 = vmatpush1.msra.mxu0 0.0
    %79 = vmatprep.subr.mxu0 0.0
    %80 = vmatpush1.msra.mxu0 0.0
    %81 = vmatprep.subr.mxu0 0.0
    %82 = vmatpush1.msra.mxu0 0.0
    %83 = vmatprep.subr.mxu0 0.0
    %84 = vmatpush1.msra.mxu0 0.0
    %85 = vmatprep.subr.mxu0 0.0
    %86 = vmatpush1.msra.mxu0 0.0
    %87 = vmatprep.subr.mxu0 0.0
    %88 = vmatpush1.msra.mxu0 0.0
    %89 = vmatprep.subr.mxu0 0.0
    %90 = vmatpush1.msra.mxu0 0.0
    %91 = vmatprep.subr.mxu0 0.0
    %92 = vmatpush1.msra.mxu0 0.0
    %93 = vmatprep.subr.mxu0 0.0
    %94 = vmatpush1.msra.mxu0 0.0
    %95 = vmatprep.subr.mxu0 0.0
    %96 = vmatpush1.msra.mxu0 0.0
    %97 = vmatprep.subr.mxu0 0.0
    %98 = vmatpush1.msra.mxu0 0.0
    %99 = vmatprep.subr.mxu0 0.0
    %100 = vmatpush1.msra.mxu0 0.0
    %101 = vmatprep.subr.mxu0 0.0
    %102 = vmatpush1.msra.mxu0 0.0
    %103 = vmatprep.subr.mxu0 0.0
    %104 = vmatpush1.msra.mxu0 0.0
    %105 = vmatprep.subr.mxu0 0.0
    %106 = vmatpush1.msra.mxu0 0.0
    %107 = vmatprep.subr.mxu0 0.0
    %108 = vmatpush1.msra.mxu0 0.0
    %109 = vmatprep.subr.mxu0 0.0
    %110 = vmatpush1.msra.mxu0 0.0
    %111 = vmatprep.subr.mxu0 0.0
    %112 = vmatpush1.msra.mxu0 0.0
    %113 = vmatprep.subr.mxu0 0.0
    %114 = vmatpush1.msra.mxu0 0.0
    %115 = vmatprep.subr.mxu0 0.0
    %116 = vmatpush1.msra.mxu0 0.0
    %117 = vmatprep.mubr.f32.mxu0 0.0
    %118 = vmatmul.mubr.f32.gmra.mrb[0].mxu0 %v42
    %v119 = vpop.f32.mrb[0].mxu0
    %v120 = vadd.f32 0.0, %v119
    %v121 = vpop.f32.mrb[0].mxu0
    %122 = vmatprep.mubr.f32.mxu0 0.0
    %123 = vmatmul.mubr.f32.gmra.mrb[0].mxu0 %v45
    %v124 = vpop.f32.mrb[0].mxu0
    %v125 = vadd.f32 0.0, %v124
    %v126 = vpop.f32.mrb[0].mxu0
    %127 = vmatprep.mubr.f32.mxu0 0.0
    %128 = vmatmul.mubr.f32.gmra.mrb[0].mxu0 %v48
    %v129 = vpop.f32.mrb[0].mxu0
    %v130 = vadd.f32 0.0, %v129
    %v131 = vpop.f32.mrb[0].mxu0
    %132 = vmatprep.mubr.f32.mxu0 0.0
    %133 = vmatmul.mubr.f32.gmra.mrb[0].mxu0 %v51
    %v134 = vpop.f32.mrb[0].mxu0
    %v135 = vadd.f32 0.0, %v134
    %v136 = vpop.f32.mrb[0].mxu0
    %137 = vdwg.mxu0
    %v138 = vld [vmem:[#allocation2] sm:$0xff]
    %v139 = vld [vmem:[#allocation2 + $0x8] sm:$0xff]
    %v140 = vld [vmem:[#allocation2 + $0x10] sm:$0xff]
    %v141 = vld [vmem:[#allocation2 + $0x18] sm:$0xff]
    %v142 = vld [vmem:[#allocation2 + $0x20] sm:$0xff]
    %v143 = vld [vmem:[#allocation2 + $0x28] sm:$0xff]
    %v144 = vld [vmem:[#allocation2 + $0x30] sm:$0xff]
    %v145 = vld [vmem:[#allocation2 + $0x38] sm:$0xff]
    %v146 = vld [vmem:[#allocation2 + $0x40] sm:$0xff]
    %v147 = vld [vmem:[#allocation2 + $0x48] sm:$0xff]
    %v148 = vld [vmem:[#allocation2 + $0x50] sm:$0xff]
    %v149 = vld [vmem:[#allocation2 + $0x58] sm:$0xff]
    %v150 = vld [vmem:[#allocation2 + $0x60] sm:$0xff]
    %v151 = vld [vmem:[#allocation2 + $0x68] sm:$0xff]
    %v152 = vld [vmem:[#allocation2 + $0x70] sm:$0xff]
    %v153 = vld [vmem:[#allocation2 + $0x78] sm:$0xff]
    %v154 = vmul.f32 %v120, %v138
    %v155 = vmul.f32 %v125, %v139
    %v156 = vmul.f32 %v130, %v140
    %v157 = vmul.f32 %v135, %v141
    %v158 = vmul.f32 %v120, %v142
    %v159 = vmul.f32 %v125, %v143
    %v160 = vmul.f32 %v130, %v144
    %v161 = vmul.f32 %v135, %v145
    %v162 = vmul.f32 %v120, %v146
    %v163 = vmul.f32 %v125, %v147
    %v164 = vmul.f32 %v130, %v148
    %v165 = vmul.f32 %v135, %v149
    %v166 = vmul.f32 %v120, %v150
    %v167 = vmul.f32 %v125, %v151
    %v168 = vmul.f32 %v130, %v152
    %v169 = vmul.f32 %v135, %v153
    %v170 = vld [vmem:[%s2] sm:$0xff]
    %v171 = vld [vmem:[%s2 + $0x8] sm:$0xff]
    %v172 = vld [vmem:[%s2 + $0x10] sm:$0xff]
    %v173 = vld [vmem:[%s2 + $0x18] sm:$0xff]
    %v174 = vld [vmem:[%s4] sm:$0x1]
    %v176 = vlaneseq
    %v177 = vshrl.u32 %v176, 7
    %v178 = vsub.s32 0, %v177
    %v179 = vrot.slane %v174, %v178
    %181 = vmatprep.subr.mxu0 0.0
    %182 = vmatpush1.msra.mxu0 %v154
    %183 = vmatprep.subr.mxu0 0.0
    %184 = vmatpush1.msra.mxu0 %v155
    %185 = vmatprep.subr.mxu0 0.0
    %186 = vmatpush1.msra.mxu0 %v156
    %187 = vmatprep.subr.mxu0 0.0
    %188 = vmatpush1.msra.mxu0 %v157
    %189 = vmatprep.subr.mxu0 0.0
    %190 = vmatpush1.msra.mxu0 %v158
    %191 = vmatprep.subr.mxu0 0.0
    %192 = vmatpush1.msra.mxu0 %v159
    %193 = vmatprep.subr.mxu0 0.0
    %194 = vmatpush1.msra.mxu0 %v160
    %195 = vmatprep.subr.mxu0 0.0
    %196 = vmatpush1.msra.mxu0 %v161
    %197 = vmatprep.subr.mxu0 0.0
    %198 = vmatpush1.msra.mxu0 %v162
    %199 = vmatprep.subr.mxu0 0.0
    %200 = vmatpush1.msra.mxu0 %v163
    %201 = vmatprep.subr.mxu0 0.0
    %202 = vmatpush1.msra.mxu0 %v164
    %203 = vmatprep.subr.mxu0 0.0
    %204 = vmatpush1.msra.mxu0 %v165
    %205 = vmatprep.subr.mxu0 0.0
    %206 = vmatpush1.msra.mxu0 %v166
    %207 = vmatprep.subr.mxu0 0.0
    %208 = vmatpush1.msra.mxu0 %v167
    %209 = vmatprep.subr.mxu0 0.0
    %210 = vmatpush1.msra.mxu0 %v168
    %211 = vmatprep.subr.mxu0 0.0
    %212 = vmatpush1.msra.mxu0 %v169
    %213 = vmatprep.subr.mxu0 0.0
    %214 = vmatpush1.msra.mxu0 0.0
    %215 = vmatprep.subr.mxu0 0.0
    %216 = vmatpush1.msra.mxu0 0.0
    %217 = vmatprep.subr.mxu0 0.0
    %218 = vmatpush1.msra.mxu0 0.0
    %219 = vmatprep.subr.mxu0 0.0
    %220 = vmatpush1.msra.mxu0 0.0
    %221 = vmatprep.subr.mxu0 0.0
    %222 = vmatpush1.msra.mxu0 0.0
    %223 = vmatprep.subr.mxu0 0.0
    %224 = vmatpush1.msra.mxu0 0.0
    %225 = vmatprep.subr.mxu0 0.0
    %226 = vmatpush1.msra.mxu0 0.0
    %227 = vmatprep.subr.mxu0 0.0
    %228 = vmatpush1.msra.mxu0 0.0
    %229 = vmatprep.subr.mxu0 0.0
    %230 = vmatpush1.msra.mxu0 0.0
    %231 = vmatprep.subr.mxu0 0.0
    %232 = vmatpush1.msra.mxu0 0.0
    %233 = vmatprep.subr.mxu0 0.0
    %234 = vmatpush1.msra.mxu0 0.0
    %235 = vmatprep.subr.mxu0 0.0
    %236 = vmatpush1.msra.mxu0 0.0
    %237 = vmatprep.subr.mxu0 0.0
    %238 = vmatpush1.msra.mxu0 0.0
    %239 = vmatprep.subr.mxu0 0.0
    %240 = vmatpush1.msra.mxu0 0.0
    %241 = vmatprep.subr.mxu0 0.0
    %242 = vmatpush1.msra.mxu0 0.0
    %243 = vmatprep.subr.mxu0 0.0
    %244 = vmatpush1.msra.mxu0 0.0
    %245 = vmatprep.mubr.f32.mxu0 0.0
    %246 = vmatmul.mubr.f32.gmra.mrb[0].mxu0 %v170
    %v247 = vpop.f32.mrb[0].mxu0
    %v248 = vadd.f32 %v179, %v247
    %v249 = vpop.f32.mrb[0].mxu0
    %250 = vmatprep.mubr.f32.mxu0 0.0
    %251 = vmatmul.mubr.f32.gmra.mrb[0].mxu0 %v171
    %v252 = vpop.f32.mrb[0].mxu0
    %v253 = vadd.f32 %v179, %v252
    %v254 = vpop.f32.mrb[0].mxu0
    %255 = vmatprep.mubr.f32.mxu0 0.0
    %256 = vmatmul.mubr.f32.gmra.mrb[0].mxu0 %v172
    %v257 = vpop.f32.mrb[0].mxu0
    %v258 = vadd.f32 %v179, %v257
    %v259 = vpop.f32.mrb[0].mxu0
    %260 = vmatprep.mubr.f32.mxu0 0.0
    %261 = vmatmul.mubr.f32.gmra.mrb[0].mxu0 %v173
    %v262 = vpop.f32.mrb[0].mxu0
    %v263 = vadd.f32 %v179, %v262
    %v264 = vpop.f32.mrb[0].mxu0
    %265 = vdwg.mxu0
    %266 = vst [vmem:[#allocation5] sm:$0xff] %v248
    %267 = vst [vmem:[#allocation5 + $0x8] sm:$0xff] %v253
    %268 = vst [vmem:[#allocation5 + $0x10] sm:$0xff] %v258
    %269 = vst [vmem:[#allocation5 + $0x18] sm:$0xff] %v263
    // Predicated region
    $region26: #{tpu_custom_call.1} parent=1 // pred_check
      _
    $region27: #{tpu_custom_call.1} parent=1 // pred_check_branch
      %271 = sbr.rel (0) target = $region29
    $region28: #{tpu_custom_call.1} parent=1 // pred_region
      %s273 = ssub.s32 512, 512
      %274 = vsyncadd [#allocation4], %s273
      %s275 = sshll.u32 [#allocation5], 4
      %s276 = int_to_ptr.vmem [resolvable:$true] %s275
      %281 = dma.vmem_to_hbm [thread:$0]  %s276, 512, %s5, [#allocation4], 128, 128, 8
    $region29: #{tpu_custom_call.1} parent=1 // pred_fallthru
      _
    // Predicated region
    $region30: #{tpu_custom_call.1} parent=1 // pred_check
      _
    $region31: #{tpu_custom_call.1} parent=1 // pred_check_branch
      %283 = sbr.rel (0) target = $region33
    $region32: #{tpu_custom_call.1} parent=1 // pred_region
      %284 = dma.done [#allocation4], 512
    $region33: #{tpu_custom_call.1} parent=1 // pred_fallthru
      _
    %285 = vsyncpa [#allocation3], 1
    %286 = vsyncpa [#allocation4], 1

</llo_original>
